<compile_context>
chip_gen: v6e
topology: v6e:2x2x1
jax: 0.10.0
libtpu: 0.0.40
codegen_flags: <defaults>
</compile_context>

<pallas_src>
import functools

import jax
import jax.numpy as jnp
from jax import lax
from jax.experimental import pallas as pl
from jax.experimental.pallas import tpu as pltpu

LANE = 128
_VMEM_LIMIT = 64 * 1024 * 1024   # explicit scoped-VMEM limit (v5e default = 16 MiB)


def _round_up(x, m):
    return ((x + m - 1) // m) * m


def _pick_div_tile(dim, cap, align=LANE):
    """Largest `align`-multiple tile <= cap that evenly divides `dim`; falls
    back to the full dimension (always a legal TPU block)."""
    if dim <= cap:
        return dim
    t = (cap // align) * align
    while t >= align:
        if dim % t == 0:
            return t
        t -= align
    return dim


# ----------------------- stacked projection matmul --------------------------
# out[s] = x @ w[s] (+ b[s])   x:(M,K), w:(S,K,N), b:(S,1,N) -> out:(S,M,N)

def _proj_kernel(x_ref, w_ref, o_ref):
    o_ref[0] = jnp.dot(x_ref[...], w_ref[0],
                       preferred_element_type=jnp.float32).astype(o_ref.dtype)


def _proj_bias_kernel(x_ref, w_ref, b_ref, o_ref):
    acc = jnp.dot(x_ref[...], w_ref[0], preferred_element_type=jnp.float32)
    o_ref[0] = (acc + b_ref[0].astype(jnp.float32)).astype(o_ref.dtype)


def _proj_acc_kernel(x_ref, w_ref, o_ref, acc_ref):
    @pl.when(pl.program_id(3) == 0)
    def _():
        acc_ref[...] = jnp.zeros(acc_ref.shape, jnp.float32)

    acc_ref[...] += jnp.dot(x_ref[...], w_ref[0],
                            preferred_element_type=jnp.float32)

    @pl.when(pl.program_id(3) == pl.num_programs(3) - 1)
    def _():
        o_ref[0] = acc_ref[...].astype(o_ref.dtype)


def _proj_acc_bias_kernel(x_ref, w_ref, b_ref, o_ref, acc_ref):
    @pl.when(pl.program_id(3) == 0)
    def _():
        acc_ref[...] = jnp.zeros(acc_ref.shape, jnp.float32)

    acc_ref[...] += jnp.dot(x_ref[...], w_ref[0],
                            preferred_element_type=jnp.float32)

    @pl.when(pl.program_id(3) == pl.num_programs(3) - 1)
    def _():
        o_ref[0] = (acc_ref[...] + b_ref[0].astype(jnp.float32)).astype(o_ref.dtype)


def stacked_matmul(x2d, w_st, bias=None, *, tm_cap=256, tn_cap=256, tk_cap=2048):
    """x2d: (M, K); w_st: (S, K, N); bias: optional (S, 1, N). Returns (S, M, N)."""
    M, K = x2d.shape
    S, K2, N = w_st.shape
    assert K == K2
    tm = _pick_div_tile(M, tm_cap)
    tn = _pick_div_tile(N, tn_cap)
    tk = _pick_div_tile(K, tk_cap)

    if tk == K:
        # Specialized full-K path: no accumulator; S innermost so the x tile
        # index (mi, 0) is unchanged across ni/s steps -> x is DMA'd once and
        # reused for Q, K and V.  Leading parallel axis = M//tm (megacore).
        grid = (M // tm, N // tn, S)
        in_specs = [
            pl.BlockSpec((tm, K), lambda mi, ni, s: (mi, 0)),
            pl.BlockSpec((1, K, tn), lambda mi, ni, s: (s, 0, ni)),
        ]
        args = [x2d, w_st]
        if bias is not None:
            in_specs.append(pl.BlockSpec((1, 1, tn), lambda mi, ni, s: (s, 0, ni)))
            args.append(bias)
            kernel = _proj_bias_kernel
        else:
            kernel = _proj_kernel
        out_specs = pl.BlockSpec((1, tm, tn), lambda mi, ni, s: (s, mi, ni))
        scratch = []
        semantics = ("parallel", "parallel", "arbitrary")
    else:
        # Large-K fallback: f32 VMEM accumulator over the innermost K axis.
        grid = (M // tm, N // tn, S, K // tk)
        in_specs = [
            pl.BlockSpec((tm, tk), lambda mi, ni, s, ki: (mi, ki)),
            pl.BlockSpec((1, tk, tn), lambda mi, ni, s, ki: (s, ki, ni)),
        ]
        args = [x2d, w_st]
        if bias is not None:
            in_specs.append(
                pl.BlockSpec((1, 1, tn), lambda mi, ni, s, ki: (s, 0, ni)))
            args.append(bias)
            kernel = _proj_acc_bias_kernel
        else:
            kernel = _proj_acc_kernel
        out_specs = pl.BlockSpec((1, tm, tn), lambda mi, ni, s, ki: (s, mi, ni))
        scratch = [pltpu.VMEM((tm, tn), jnp.float32)]
        semantics = ("parallel", "parallel", "arbitrary", "arbitrary")

    return pl.pallas_call(
        kernel,
        out_shape=jax.ShapeDtypeStruct((S, M, N), x2d.dtype),
        grid_spec=pltpu.PrefetchScalarGridSpec(
            num_scalar_prefetch=0,
            grid=grid,
            in_specs=in_specs,
            out_specs=out_specs,
            scratch_shapes=scratch,
        ),
        compiler_params=pltpu.CompilerParams(
            dimension_semantics=semantics,
            vmem_limit_bytes=_VMEM_LIMIT),
    )(*args)


# ----------------------- flash attention (one head / step) ------------------
# q_st: (Sq, B, H, Nq_p, D); k_st/v_st: (Sk, B, H, Nk_p, D) -- may alias q_st.
# Output: (B, H, Nq_p, D).  Scale is already folded into q.

def _flash_attn_kernel(q_ref, k_ref, v_ref, o_ref, m_sc, l_sc, acc_sc,
                       *, kv_len, block_kv, needs_mask):
    ki = pl.program_id(3)

    @pl.when(ki == 0)
    def _():
        m_sc[...] = jnp.full(m_sc.shape, -jnp.inf, jnp.float32)
        l_sc[...] = jnp.zeros(l_sc.shape, jnp.float32)
        acc_sc[...] = jnp.zeros(acc_sc.shape, jnp.float32)

    q = q_ref[0, 0, 0]                                   # (tq, D)
    k = k_ref[0, 0, 0]                                   # (tkv, D)
    v = v_ref[0, 0, 0]                                   # (tkv, D)

    # sim = q @ k^T  (f32 accumulation on the MXU; scale folded into Wq)
    s = lax.dot_general(q, k, (((1,), (1,)), ((), ())),
                        preferred_element_type=jnp.float32)  # (tq, tkv)

    if needs_mask:   # static: only when the KV axis was padded to 128
        col = ki * block_kv + lax.broadcasted_iota(jnp.int32, s.shape, 1)
        s = jnp.where(col < kv_len, s, jnp.finfo(jnp.float32).min)

    m_prev = m_sc[...]
    m_new = jnp.maximum(m_prev, jnp.max(s, axis=-1, keepdims=True))
    alpha = jnp.exp(m_prev - m_new)
    p = jnp.exp(s - m_new)                               # f32
    l_sc[...] = alpha * l_sc[...] + jnp.sum(p, axis=-1, keepdims=True)
    # PV matmul in the input dtype (bf16-friendly), f32 accumulation.
    acc_sc[...] = alpha * acc_sc[...] + jnp.dot(
        p.astype(v.dtype), v, preferred_element_type=jnp.float32)
    m_sc[...] = m_new

    @pl.when(ki == pl.num_programs(3) - 1)
    def _():
        inv_l = pl.reciprocal(l_sc[...], approx=False)   # exact: 1e-4 tolerance
        o_ref[0, 0] = (acc_sc[...] * inv_l).astype(o_ref.dtype)


def flash_attention(q_st, k_st, v_st, q_sel, k_sel, v_sel, *, kv_len,
                    tq_cap=256, tkv_cap=256):
    _, B, H, Nq_p, D = q_st.shape
    _, _, _, Nk_p, _ = k_st.shape
    tq = _pick_div_tile(Nq_p, tq_cap)      # multiples of 128 (Nq_p is padded)
    tkv = _pick_div_tile(Nk_p, tkv_cap)
    grid = (Nq_p // tq, B, H, Nk_p // tkv)     # Nq tiles lead (megacore on v7x)

    kernel = functools.partial(_flash_attn_kernel, kv_len=kv_len,
                               block_kv=tkv, needs_mask=(Nk_p != kv_len))
    return pl.pallas_call(
        kernel,
        out_shape=jax.ShapeDtypeStruct((B, H, Nq_p, D), q_st.dtype),
        grid_spec=pltpu.PrefetchScalarGridSpec(
            num_scalar_prefetch=0,
            grid=grid,
            in_specs=[
                pl.BlockSpec((1, 1, 1, tq, D),
                             lambda qi, b, h, ki: (q_sel, b, h, qi, 0)),
                pl.BlockSpec((1, 1, 1, tkv, D),
                             lambda qi, b, h, ki: (k_sel, b, h, ki, 0)),
                pl.BlockSpec((1, 1, 1, tkv, D),
                             lambda qi, b, h, ki: (v_sel, b, h, ki, 0)),
            ],
            out_specs=pl.BlockSpec((1, 1, tq, D),
                                   lambda qi, b, h, ki: (b, h, qi, 0)),
            scratch_shapes=[
                pltpu.VMEM((tq, 1), jnp.float32),    # running max
                pltpu.VMEM((tq, 1), jnp.float32),    # running sum
                pltpu.VMEM((tq, D), jnp.float32),    # running PV accumulator
            ],
        ),
        compiler_params=pltpu.CompilerParams(
            dimension_semantics=("parallel", "parallel", "parallel", "arbitrary"),
            vmem_limit_bytes=_VMEM_LIMIT),
    )(q_st, k_st, v_st)


# ------------------------------- module glue --------------------------------

def init_cross_attention_params(key, query_dim, context_dim=None, heads=8,
                                dim_head=64, dtype=jnp.float32):
    context_dim = query_dim if context_dim is None else context_dim
    inner_dim = dim_head * heads
    k1, k2, k3, k4, k5 = jax.random.split(key, 5)
    s = 0.02
    # Stored as (in, out), i.e. transposed relative to PyTorch's (out, in).
    return {
        "wq": (jax.random.normal(k1, (query_dim, inner_dim)) * s).astype(dtype),
        "wk": (jax.random.normal(k2, (context_dim, inner_dim)) * s).astype(dtype),
        "wv": (jax.random.normal(k3, (context_dim, inner_dim)) * s).astype(dtype),
        "wo": (jax.random.normal(k4, (inner_dim, query_dim)) * s).astype(dtype),
        "bo": (jax.random.normal(k5, (query_dim,)) * s).astype(dtype),
    }


def cross_attention_forward(params, x, heads, context=None, compute_dtype=None):
    """x: (B, Nq, query_dim); context: optional (B, Nk, context_dim)."""
    out_dtype = x.dtype
    if compute_dtype is not None:
        x = x.astype(compute_dtype)
        context = None if context is None else context.astype(compute_dtype)
        params = {k: v.astype(compute_dtype) for k, v in params.items()}

    B, Nq, Cq = x.shape
    inner_dim = params["wq"].shape[1]
    assert inner_dim % heads == 0
    dim_head = inner_dim // heads
    scale = float(dim_head) ** (-0.5)

    # Fold the softmax scale into Wq (free, removes per-element sim*scale).
    wq = (params["wq"] * scale).astype(params["wq"].dtype)

    # Pad sequence lengths to multiples of 128 -> lane-dense, MXU-aligned tiles.
    Nq_p = _round_up(Nq, LANE)
    x_p = x if Nq_p == Nq else jnp.pad(x, ((0, 0), (0, Nq_p - Nq), (0, 0)))

    def split_heads(t_st):  # (S, B*N, inner) -> (S, B, H, N, dim_head)
        S_, M_, _ = t_st.shape
        t = t_st.reshape(S_, B, M_ // B, heads, dim_head)
        return jnp.transpose(t, (0, 1, 3, 2, 4))

    if context is None:
        # Self-attention: one fused QKV projection (x read from HBM once).
        Nk, Nk_p = Nq, Nq_p
        w3 = jnp.stack([wq, params["wk"], params["wv"]], axis=0)
        qkv = split_heads(stacked_matmul(x_p.reshape(B * Nq_p, Cq), w3))
        q_st = k_st = v_st = qkv                         # (3, B, H, Nq_p, D)
        q_sel, k_sel, v_sel = 0, 1, 2
    else:
        _, Nk, Cc = context.shape
        Nk_p = _round_up(Nk, LANE)
        c_p = context if Nk_p == Nk else jnp.pad(
            context, ((0, 0), (0, Nk_p - Nk), (0, 0)))
        q_st = split_heads(stacked_matmul(x_p.reshape(B * Nq_p, Cq), wq[None]))
        wkv = jnp.stack([params["wk"], params["wv"]], axis=0)   # fused K|V
        k_st = v_st = split_heads(stacked_matmul(c_p.reshape(B * Nk_p, Cc), wkv))
        q_sel, k_sel, v_sel = 0, 0, 1

    # Flash attention over the (padded, masked) KV axis; one head / grid step.
    out = flash_attention(q_st, k_st, v_st, q_sel, k_sel, v_sel, kv_len=Nk)

    # Merge heads back to (B*Nq_p, inner) and apply the output projection.
    out = jnp.transpose(out, (0, 2, 1, 3)).reshape(B * Nq_p, inner_dim)
    y = stacked_matmul(out, params["wo"][None],
                       bias=params["bo"].reshape(1, 1, -1))     # (1, B*Nq_p, Cq)
    y = y.reshape(B, Nq_p, -1)[:, :Nq, :]
    return y.astype(out_dtype)


# Pure-JAX reference for sanity checking.
def cross_attention_ref(params, x, heads, context=None):
    B, Nq, _ = x.shape
    ctx = x if context is None else context
    _, Nk, _ = ctx.shape
    inner_dim = params["wq"].shape[1]
    dim_head = inner_dim // heads
    scale = float(dim_head) ** (-0.5)
    q = x @ params["wq"]
    k = ctx @ params["wk"]
    v = ctx @ params["wv"]

    def sh(t, n):
        return t.reshape(B, n, heads, dim_head).transpose(0, 2, 1, 3)

    qh, kh, vh = sh(q, Nq), sh(k, Nk), sh(v, Nk)
    sim = jnp.einsum("bhid,bhjd->bhij", qh, kh) * scale
    attn = jax.nn.softmax(sim, axis=-1)
    out = jnp.einsum("bhij,bhjd->bhid", attn, vh)
    out = out.transpose(0, 2, 1, 3).reshape(B, Nq, inner_dim)
    return out @ params["wo"] + params["bo"]


# ----------------------------------- main ------------------------------------

if __name__ == "__main__":
    key = jax.random.PRNGKey(0)
    k_param, k_x, k_ctx = jax.random.split(key, 3)

    B, N = 2, 8
    query_dim = 32
    heads, dim_head = 4, 8          # inner_dim = 32

    params = init_cross_attention_params(
        k_param, query_dim, context_dim=None, heads=heads, dim_head=dim_head)
    x = jax.random.normal(k_x, (B, N, query_dim), dtype=jnp.float32)

    # Self-attention path (context=None); exercises the padded-KV mask (8->128).
    out = jax.block_until_ready(cross_attention_forward(params, x, heads))
    ref = cross_attention_ref(params, x, heads)
    assert out.shape == (B, N, query_dim), out.shape
    assert jnp.allclose(out, ref, atol=1e-4, rtol=1e-4), \
        float(jnp.max(jnp.abs(out - ref)))

    # Cross-attention path (ragged context length, exercises padding + mask).
    ctx = jax.random.normal(k_ctx, (B, 12, query_dim), dtype=jnp.float32)
    out2 = jax.block_until_ready(
        cross_attention_forward(params, x, heads, context=ctx))
    ref2 = cross_attention_ref(params, x, heads, context=ctx)
    assert jnp.allclose(out2, ref2, atol=1e-4, rtol=1e-4), \
        float(jnp.max(jnp.abs(out2 - ref2)))

    # bf16 activations (f32 accumulation / softmax stats): smoke test.
    out_bf = jax.block_until_ready(
        cross_attention_forward(params, x, heads, compute_dtype=jnp.bfloat16))
    assert out_bf.shape == (B, N, query_dim)
    assert bool(jnp.isfinite(out_bf.astype(jnp.float32)).all())
    assert jnp.allclose(out_bf.astype(jnp.float32), ref, atol=0.1, rtol=0.1)

    print("KERNEL_OK")
</pallas_src>

<mosaic_0001>
module attributes {stable_mosaic.version = 11 : i64} {
  func.func @_proj_kernel(%arg0: i32, %arg1: i32, %arg2: i32, %arg3: memref<256x32xf32, #tpu.memory_space<vmem>>, %arg4: memref<1x32x32xf32, #tpu.memory_space<vmem>>, %arg5: memref<1x256x32xf32, #tpu.memory_space<vmem>>) attributes {dimension_semantics = [#tpu.dimension_semantics<parallel>, #tpu.dimension_semantics<parallel>, #tpu.dimension_semantics<arbitrary>], iteration_bounds = array<i64: 1, 1, 3>, scalar_prefetch = 0 : i64, scratch_operands = 0 : i64, tpu.core_type = #tpu.core_type<tc>, window_params = [{transform_indices = @transform_0, window_bounds = array<i64: 256, 32>}, {transform_indices = @transform_1, window_bounds = array<i64: 1, 32, 32>}, {transform_indices = @transform_2, window_bounds = array<i64: 1, 256, 32>}]} {
    %c0 = arith.constant 0 : index
    %c0_0 = arith.constant 0 : index
    %0 = vector.load %arg3[%c0, %c0_0] : memref<256x32xf32, #tpu.memory_space<vmem>>, vector<256x32xf32>
    %c0_1 = arith.constant 0 : index
    %c0_2 = arith.constant 0 : index
    %c0_3 = arith.constant 0 : index
    %1 = vector.load %arg4[%c0_1, %c0_2, %c0_3] : memref<1x32x32xf32, #tpu.memory_space<vmem>>, vector<1x32x32xf32>
    %2 = vector.shape_cast %1 : vector<1x32x32xf32> to vector<32x32xf32>
    %cst = arith.constant dense<0.000000e+00> : vector<256x32xf32>
    %3 = tpu.matmul %0, %2, %cst {dimension_numbers = #tpu.dot_dimension_numbers<[1], [0], [0], [1], [0, 0, 1, 1], [], []>} : vector<256x32xf32>, vector<32x32xf32>, vector<256x32xf32> -> vector<256x32xf32>
    %c0_4 = arith.constant 0 : index
    %c0_5 = arith.constant 0 : index
    %c0_6 = arith.constant 0 : index
    %4 = vector.load %arg5[%c0_4, %c0_5, %c0_6] : memref<1x256x32xf32, #tpu.memory_space<vmem>>, vector<1x256x32xf32>
    %5 = vector.shape_cast %4 : vector<1x256x32xf32> to vector<256x32xf32>
    %6 = vector.shape_cast %3 : vector<256x32xf32> to vector<1x256x32xf32>
    tpu.vector_store %arg5[%c0_4, %c0_5, %c0_6], %6 {strides = array<i32>} : memref<1x256x32xf32, #tpu.memory_space<vmem>>, vector<1x256x32xf32>,
    return
  }
  func.func @transform_0(%arg0: i32, %arg1: i32, %arg2: i32) -> (i32, i32) {
    %c0_i32 = arith.constant 0 : i32
    %c0_i32_0 = arith.constant 0 : i32
    return %arg0, %c0_i32 : i32, i32
  }
  func.func @transform_1(%arg0: i32, %arg1: i32, %arg2: i32) -> (i32, i32, i32) {
    %c0_i32 = arith.constant 0 : i32
    %c0_i32_0 = arith.constant 0 : i32
    return %arg2, %c0_i32, %arg1 : i32, i32, i32
  }
  func.func @transform_2(%arg0: i32, %arg1: i32, %arg2: i32) -> (i32, i32, i32) {
    %c0_i32 = arith.constant 0 : i32
    return %arg2, %arg0, %arg1 : i32, i32, i32
  }
}

</mosaic_0001>

<llo_original>
// kernel: tpu_custom_call.1
$region0: #{tpu_custom_call.1}
  #allocation0 [shape = 'u32[]', space=smem, size = 0x4, offset = 0x4, fixed_abs, tag = 'smem constant byte address 0x4 - core index']
  #allocation1 [shape = 'u32[144,128]{1,0:T(1,128)}', space=vmem, size = 0x12000, scoped, tag = 'internal scratch']
  %s0 = inlined_call_operand.vmem [shape: f32[256,32], index: 0, kind: input, shape index: {}]
  %s1 = inlined_call_operand.vmem [shape: f32[3,32,32], index: 1, kind: input, shape index: {}]
  %s2 = inlined_call_operand.vmem [shape: f32[3,256,32], index: 2, kind: output, shape index: {}]
  %s3 = sld [smem:[#allocation0]]
  $region41: #{tpu_custom_call.1} parent=0
    _
  %s5 = ssub.s32 1, %s3
  %s6 = scalar_select 0, %s5, %s3
  loop: start=0, step=1, limit=5
  $region2: #{tpu_custom_call.1} parent=0 // loop_pre_header
    _
  $region3: #{tpu_custom_call.1} parent=0 // loop_header
    %s8 = sphi 0, %s12
    %p9 = scmp.ge.s32.totalorder %s8, 5
    %s15 = sphi 0, %s34
    %s16 = sphi 0, %s30
    %s17 = sphi 0, %s26
    %s18 = sphi 0, %s15
    %s19 = sphi 0, %s16
    %s20 = sphi 0, %s17
    %s21 = sphi 0, %s18
    %s22 = sphi 0, %s19
    %s23 = sphi 0, %s20
    %s37 = sphi 0, %s39
    %s40 = sphi 0, %s37
    %s41 = sphi 0, %s40
    %s57 = sphi 0, %s41
    %s65 = sphi 0, %s67
    %s68 = sphi 0, %s65
    %s69 = sphi 0, %s68
    %s85 = sphi 0, %s69
    %s95 = sphi 0, %s97
    %s98 = sphi 0, %s95
    %s99 = sphi 0, %s98
    %s115 = sphi 0, %s99
  $region4: #{tpu_custom_call.1} parent=0 // loop_header_branch
    %11 = sbr.rel (%p9) target = $region8
  $region5: #{tpu_custom_call.1} parent=0 // loop_body
    %s13 = ssub.s32 %s8, 1
    %s14 = ssub.s32 %s8, 2
    %s24 = sadd.s32 1, %s17
    %p25 = scmp.ge.s32.totalorder %s24, 3
    %s26 = scalar_select %p25, 0, %s24
    %s27 = sadd.s32 1, %s16
    %s28 = scalar_select %p25, %s27, %s16
    %p29 = scmp.ge.s32.totalorder %s28, 1
    %s30 = scalar_select %p29, 0, %s28
    %s31 = sadd.s32 1, %s15
    %s32 = scalar_select %p29, %s31, %s15
    %p33 = scmp.ge.s32.totalorder %s32, 1
    %s34 = scalar_select %p33, 0, %s32
    %s35 = ssub.s32 %s15, %s34
    %p36 = scmp.eq.s32.totalorder %s35, 0
    %s38 = sadd.s32 %s37, 1
    %s39 = scalar_select %p36, %s37, %s38
    %p42 = pneg %p36
    %p43 = scmp.eq.s32.totalorder %s8, 2
    %p44 = por %p42, %p43
    %p45 = scmp.ne.s32.totalorder %s37, %s40
    %p46 = scmp.eq.s32.totalorder %s8, 0
    %p47 = por %p45, %p46
    %p48 = scmp.ne.s32.totalorder %s37, %s40
    %p49 = scmp.eq.s32.totalorder %s13, 2
    %p50 = por %p48, %p49
    %p51 = scmp.ne.s32.totalorder %s40, %s41
    %p52 = scmp.eq.s32.totalorder %s13, 0
    %p53 = por %p51, %p52
    %p54 = scmp.ne.s32.totalorder %s40, %s41
    %p55 = scmp.eq.s32.totalorder %s14, 2
    %p56 = por %p54, %p55
    %p58 = scmp.ne.s32.totalorder %s41, %s57
    %p59 = scmp.eq.s32.totalorder %s14, 0
    %p60 = por %p58, %p59
    %s61 = ssub.s32 %s17, %s26
    %s62 = ssub.s32 %s16, %s30
    %s63 = sor.u32 %s61, %s62
    %p64 = scmp.eq.s32.totalorder %s63, 0
    %s66 = sadd.s32 %s65, 1
    %s67 = scalar_select %p64, %s65, %s66
    %p70 = pneg %p64
    %p71 = scmp.eq.s32.totalorder %s8, 2
    %p72 = por %p70, %p71
    %p73 = scmp.ne.s32.totalorder %s65, %s68
    %p74 = scmp.eq.s32.totalorder %s8, 0
    %p75 = por %p73, %p74
    %p76 = scmp.ne.s32.totalorder %s65, %s68
    %p77 = scmp.eq.s32.totalorder %s13, 2
    %p78 = por %p76, %p77
    %p79 = scmp.ne.s32.totalorder %s68, %s69
    %p80 = scmp.eq.s32.totalorder %s13, 0
    %p81 = por %p79, %p80
    %p82 = scmp.ne.s32.totalorder %s68, %s69
    %p83 = scmp.eq.s32.totalorder %s14, 2
    %p84 = por %p82, %p83
    %p86 = scmp.ne.s32.totalorder %s69, %s85
    %p87 = scmp.eq.s32.totalorder %s14, 0
    %p88 = por %p86, %p87
    %s89 = ssub.s32 %s17, %s26
    %s90 = ssub.s32 %s15, %s34
    %s91 = sor.u32 %s89, %s90
    %s92 = ssub.s32 %s16, %s30
    %s93 = sor.u32 %s91, %s92
    %p94 = scmp.eq.s32.totalorder %s93, 0
    %s96 = sadd.s32 %s95, 1
    %s97 = scalar_select %p94, %s95, %s96
    %p100 = pneg %p94
    %p101 = scmp.eq.s32.totalorder %s8, 2
    %p102 = por %p100, %p101
    %p103 = scmp.ne.s32.totalorder %s95, %s98
    %p104 = scmp.eq.s32.totalorder %s8, 0
    %p105 = por %p103, %p104
    %p106 = scmp.ne.s32.totalorder %s95, %s98
    %p107 = scmp.eq.s32.totalorder %s13, 2
    %p108 = por %p106, %p107
    %p109 = scmp.ne.s32.totalorder %s98, %s99
    %p110 = scmp.eq.s32.totalorder %s13, 0
    %p111 = por %p109, %p110
    %p112 = scmp.ne.s32.totalorder %s98, %s99
    %p113 = scmp.eq.s32.totalorder %s14, 2
    %p114 = por %p112, %p113
    %p116 = scmp.ne.s32.totalorder %s99, %s115
    %p117 = scmp.eq.s32.totalorder %s14, 0
    %p118 = por %p116, %p117
    %p119 = scmp.le.s32.totalorder 1, %s8
    %p120 = scmp.lt.s32.totalorder %s8, 4
    %p121 = pnand %p119, %p120
    %p122 = pneg %p121
    // Predicated region
    $region9: #{tpu_custom_call.1} parent=5 // pred_check
      _
    $region10: #{tpu_custom_call.1} parent=5 // pred_check_branch
      %124 = sbr.rel (%p121) target = $region12
    $region11: #{tpu_custom_call.1} parent=5 // pred_region
      %s125 = ssub.s32 %s8, 1
      // Predicated region
      $region13: #{tpu_custom_call.1} parent=11 // pred_check
        %p126 = pneg %p53
      $region14: #{tpu_custom_call.1} parent=11 // pred_check_branch
        %128 = sbr.rel (%p126) target = $region16
      $region15: #{tpu_custom_call.1} parent=11 // pred_region
        %s129 = smul.u32 32, %s18
        %p130 = scmp.lt.s32.totalorder %s129, 31
        %s131 = scalar_select %p130, %s129, 31
        %s132 = smul.addr %s131, 8
        %s133 = scalar_lea.vmem %s0, %s132
        %s134 = smul.u32 32, %s18
      $region16: #{tpu_custom_call.1} parent=11 // pred_fallthru
        _
    $region12: #{tpu_custom_call.1} parent=5 // pred_fallthru
      _
    %p135 = scmp.lt.s32.totalorder %s8, 3
    // Predicated region
    $region17: #{tpu_custom_call.1} parent=5 // pred_check
      %p136 = pneg %p135
    $region18: #{tpu_custom_call.1} parent=5 // pred_check_branch
      %138 = sbr.rel (%p136) target = $region20
    $region19: #{tpu_custom_call.1} parent=5 // pred_region
      // Predicated region
      $region21: #{tpu_custom_call.1} parent=19 // pred_check
        %p139 = pneg %p75
      $region22: #{tpu_custom_call.1} parent=19 // pred_check_branch
        %141 = sbr.rel (%p139) target = $region24
      $region23: #{tpu_custom_call.1} parent=19 // pred_region
        %p142 = scmp.lt.s32.totalorder %s17, 2
        %s143 = scalar_select %p142, %s17, 2
        %p144 = scmp.lt.s32.totalorder %s16, 0
        %s145 = scalar_select %p144, %s16, 0
        %s146 = smul.addr %s143, 4
        %s147 = sadd.s32 %s145, %s146
        %s148 = smul.addr %s147, 8
        %s149 = scalar_lea.vmem %s1, %s148
      $region24: #{tpu_custom_call.1} parent=19 // pred_fallthru
        _
    $region20: #{tpu_custom_call.1} parent=5 // pred_fallthru
      _
    %p150 = scmp.le.s32.totalorder 1, %s8
    %p151 = scmp.lt.s32.totalorder %s8, 4
    %p152 = pnand %p150, %p151
    %p153 = pneg %p152
    // Predicated region
    $region25: #{tpu_custom_call.1} parent=5 // pred_check
      _
    $region26: #{tpu_custom_call.1} parent=5 // pred_check_branch
      %155 = sbr.rel (%p152) target = $region28
    $region27: #{tpu_custom_call.1} parent=5 // pred_region
      %s156 = ssub.s32 %s8, 1
      %s157 = smul.u32 32, %s18
      %p158 = scmp.lt.s32.totalorder %s157, 31
      %s159 = scalar_select %p158, %s157, 31
      %s160 = smul.addr %s159, 8
      %s161 = scalar_lea.vmem %s0, %s160
      %p162 = pneg %p53
      %p163 = pneg %p50
      %p164 = scmp.lt.s32.totalorder %s20, 2
      %s165 = scalar_select %p164, %s20, 2
      %p166 = scmp.lt.s32.totalorder %s19, 0
      %s167 = scalar_select %p166, %s19, 0
      %s168 = smul.addr %s165, 4
      %s169 = sadd.s32 %s167, %s168
      %s170 = smul.addr %s169, 8
      %s171 = scalar_lea.vmem %s1, %s170
      %p172 = pneg %p81
      %p173 = pneg %p78
      %p174 = pneg %p111
      %p175 = pneg %p108
      %s176 = smul.u32 32, %s18
      %p177 = scmp.lt.s32.totalorder %s20, 2
      %s178 = scalar_select %p177, %s20, 2
      %p179 = scmp.lt.s32.totalorder %s176, 31
      %s180 = scalar_select %p179, %s176, 31
      %p181 = scmp.lt.s32.totalorder %s19, 0
      %s182 = scalar_select %p181, %s19, 0
      %s183 = sadd.s32 %s182, %s180
      %s184 = smul.addr %s178, 32
      %s185 = sadd.s32 %s183, %s184
      %s186 = smul.addr %s185, 8
      %s187 = scalar_lea.vmem %s2, %s186
      %s188 = smul.u32 32, %s18
      %p189 = scmp.lt.s32.totalorder %s188, 31
      %s190 = scalar_select %p189, %s188, 31
      %s191 = smul.addr %s190, 8
      %s192 = scalar_lea.vmem %s0, %s191
      %s193 = smul.u32 32, %s18
      %p194 = scmp.lt.s32.totalorder %s20, 2
      %s195 = scalar_select %p194, %s20, 2
      %p196 = scmp.lt.s32.totalorder %s19, 0
      %s197 = scalar_select %p196, %s19, 0
      %s198 = smul.addr %s195, 4
      %s199 = sadd.s32 %s197, %s198
      %s200 = smul.addr %s199, 8
      %s201 = scalar_lea.vmem %s1, %s200
      %s202 = smul.u32 32, %s18
      %p203 = scmp.lt.s32.totalorder %s20, 2
      %s204 = scalar_select %p203, %s20, 2
      %p205 = scmp.lt.s32.totalorder %s202, 31
      %s206 = scalar_select %p205, %s202, 31
      %p207 = scmp.lt.s32.totalorder %s19, 0
      %s208 = scalar_select %p207, %s19, 0
      %s209 = sadd.s32 %s208, %s206
      %s210 = smul.addr %s204, 32
      %s211 = sadd.s32 %s209, %s210
      %s212 = smul.addr %s211, 8
      %s213 = scalar_lea.vmem %s2, %s212
      %s214 = smul.u32 32, %s18
      %v215 = vld [vmem:[%s192] sm:$0xff]
      %v216 = vld [vmem:[%s192 + $0x8] sm:$0xff]
      %v217 = vld [vmem:[%s192 + $0x10] sm:$0xff]
      %v218 = vld [vmem:[%s192 + $0x18] sm:$0xff]
      %v219 = vld [vmem:[%s192 + $0x20] sm:$0xff]
      %v220 = vld [vmem:[%s192 + $0x28] sm:$0xff]
      %v221 = vld [vmem:[%s192 + $0x30] sm:$0xff]
      %v222 = vld [vmem:[%s192 + $0x38] sm:$0xff]
      %v223 = vld [vmem:[%s192 + $0x40] sm:$0xff]
      %v224 = vld [vmem:[%s192 + $0x48] sm:$0xff]
      %v225 = vld [vmem:[%s192 + $0x50] sm:$0xff]
      %v226 = vld [vmem:[%s192 + $0x58] sm:$0xff]
      %v227 = vld [vmem:[%s192 + $0x60] sm:$0xff]
      %v228 = vld [vmem:[%s192 + $0x68] sm:$0xff]
      %v229 = vld [vmem:[%s192 + $0x70] sm:$0xff]
      %v230 = vld [vmem:[%s192 + $0x78] sm:$0xff]
      %v231 = vld [vmem:[%s192 + $0x80] sm:$0xff]
      %v232 = vld [vmem:[%s192 + $0x88] sm:$0xff]
      %v233 = vld [vmem:[%s192 + $0x90] sm:$0xff]
      %v234 = vld [vmem:[%s192 + $0x98] sm:$0xff]
      %v235 = vld [vmem:[%s192 + $0xa0] sm:$0xff]
      %v236 = vld [vmem:[%s192 + $0xa8] sm:$0xff]
      %v237 = vld [vmem:[%s192 + $0xb0] sm:$0xff]
      %v238 = vld [vmem:[%s192 + $0xb8] sm:$0xff]
      %v239 = vld [vmem:[%s192 + $0xc0] sm:$0xff]
      %v240 = vld [vmem:[%s192 + $0xc8] sm:$0xff]
      %v241 = vld [vmem:[%s192 + $0xd0] sm:$0xff]
      %v242 = vld [vmem:[%s192 + $0xd8] sm:$0xff]
      %v243 = vld [vmem:[%s192 + $0xe0] sm:$0xff]
      %v244 = vld [vmem:[%s192 + $0xe8] sm:$0xff]
      %v245 = vld [vmem:[%s192 + $0xf0] sm:$0xff]
      %v246 = vld [vmem:[%s192 + $0xf8] sm:$0xff]
      %v247 = vld [vmem:[%s201] sm:$0xff]
      %v248 = vld [vmem:[%s201 + $0x8] sm:$0xff]
      %v249 = vld [vmem:[%s201 + $0x10] sm:$0xff]
      %v250 = vld [vmem:[%s201 + $0x18] sm:$0xff]
      %vm251 = vcmask 261120
      %v253 = vsel %vm251, %v215, 0
      %v256 = vsel %vm251, %v216, 0
      %v259 = vsel %vm251, %v217, 0
      %v262 = vsel %vm251, %v218, 0
      %v265 = vsel %vm251, %v219, 0
      %v268 = vsel %vm251, %v220, 0
      %v271 = vsel %vm251, %v221, 0
      %v274 = vsel %vm251, %v222, 0
      %v277 = vsel %vm251, %v223, 0
      %v280 = vsel %vm251, %v224, 0
      %v283 = vsel %vm251, %v225, 0
      %v286 = vsel %vm251, %v226, 0
      %v289 = vsel %vm251, %v227, 0
      %v292 = vsel %vm251, %v228, 0
      %v295 = vsel %vm251, %v229, 0
      %v298 = vsel %vm251, %v230, 0
      %v301 = vsel %vm251, %v231, 0
      %v304 = vsel %vm251, %v232, 0
      %v307 = vsel %vm251, %v233, 0
      %v310 = vsel %vm251, %v234, 0
      %v313 = vsel %vm251, %v235, 0
      %v316 = vsel %vm251, %v236, 0
      %v319 = vsel %vm251, %v237, 0
      %v322 = vsel %vm251, %v238, 0
      %v325 = vsel %vm251, %v239, 0
      %v328 = vsel %vm251, %v240, 0
      %v331 = vsel %vm251, %v241, 0
      %v334 = vsel %vm251, %v242, 0
      %v337 = vsel %vm251, %v243, 0
      %v340 = vsel %vm251, %v244, 0
      %v343 = vsel %vm251, %v245, 0
      %v346 = vsel %vm251, %v246, 0
      %348 = vmatprep.subr.mxu0 0.0
      %349 = vmatpush1.msra.mxu0 0.0
      %350 = vmatprep.subr.mxu0 0.0
      %351 = vmatpush1.msra.mxu0 0.0
      %352 = vmatprep.subr.mxu0 0.0
      %353 = vmatpush1.msra.mxu0 0.0
      %354 = vmatprep.subr.mxu0 0.0
      %355 = vmatpush1.msra.mxu0 0.0
      %356 = vmatprep.subr.mxu0 0.0
      %357 = vmatpush1.msra.mxu0 0.0
      %358 = vmatprep.subr.mxu0 0.0
      %359 = vmatpush1.msra.mxu0 0.0
      %360 = vmatprep.subr.mxu0 0.0
      %361 = vmatpush1.msra.mxu0 0.0
      %362 = vmatprep.subr.mxu0 0.0
      %363 = vmatpush1.msra.mxu0 0.0
      %364 = vmatprep.subr.mxu0 0.0
      %365 = vmatpush1.msra.mxu0 0.0
      %366 = vmatprep.subr.mxu0 0.0
      %367 = vmatpush1.msra.mxu0 0.0
      %368 = vmatprep.subr.mxu0 0.0
      %369 = vmatpush1.msra.mxu0 0.0
      %370 = vmatprep.subr.mxu0 0.0
      %371 = vmatpush1.msra.mxu0 0.0
      %372 = vmatprep.subr.mxu0 0.0
      %373 = vmatpush1.msra.mxu0 %v250
      %374 = vmatprep.subr.mxu0 0.0
      %375 = vmatpush1.msra.mxu0 %v249
      %376 = vmatprep.subr.mxu0 0.0
      %377 = vmatpush1.msra.mxu0 %v248
      %378 = vmatprep.subr.mxu0 0.0
      %379 = vmatpush1.msra.mxu0 %v247
      %380 = vmatprep.subr.mxu0 0.0
      %381 = vmatpush2.msra.mxu0 0.0
      %382 = vmatprep.subr.mxu0 0.0
      %383 = vmatpush2.msra.mxu0 0.0
      %384 = vmatprep.subr.mxu0 0.0
      %385 = vmatpush2.msra.mxu0 0.0
      %386 = vmatprep.subr.mxu0 0.0
      %387 = vmatpush2.msra.mxu0 0.0
      %388 = vmatprep.subr.mxu0 0.0
      %389 = vmatpush2.msra.mxu0 0.0
      %390 = vmatprep.subr.mxu0 0.0
      %391 = vmatpush2.msra.mxu0 0.0
      %392 = vmatprep.subr.mxu0 0.0
      %393 = vmatpush2.msra.mxu0 0.0
      %394 = vmatprep.subr.mxu0 0.0
      %395 = vmatpush2.msra.mxu0 0.0
      %396 = vmatprep.subr.mxu0 0.0
      %397 = vmatpush2.msra.mxu0 0.0
      %398 = vmatprep.subr.mxu0 0.0
      %399 = vmatpush2.msra.mxu0 0.0
      %400 = vmatprep.subr.mxu0 0.0
      %401 = vmatpush2.msra.mxu0 0.0
      %402 = vmatprep.subr.mxu0 0.0
      %403 = vmatpush2.msra.mxu0 0.0
      %404 = vmatprep.subr.mxu0 0.0
      %405 = vmatpush2.msra.mxu0 0.0
      %406 = vmatprep.subr.mxu0 0.0
      %407 = vmatpush2.msra.mxu0 0.0
      %408 = vmatprep.subr.mxu0 0.0
      %409 = vmatpush2.msra.mxu0 0.0
      %410 = vmatprep.subr.mxu0 0.0
      %411 = vmatpush2.msra.mxu0 0.0
      %412 = vmatprep.mubr.f32.mxu0 0.0
      %413 = vmatmul.mubr.f32.gmra.mxu0 %v253
      %v414 = vpop.f32.mrf.mxu0
      %v415 = vadd.f32 0.0, %v414
      %v416 = vpop.f32.mrf.mxu0
      %417 = vmatprep.mubr.f32.mxu0 0.0
      %418 = vmatmul.mubr.f32.gmra.mxu0 %v256
      %v419 = vpop.f32.mrf.mxu0
      %v420 = vadd.f32 0.0, %v419
      %v421 = vpop.f32.mrf.mxu0
      %422 = vmatprep.mubr.f32.mxu0 0.0
      %423 = vmatmul.mubr.f32.gmra.mxu0 %v259
      %v424 = vpop.f32.mrf.mxu0
      %v425 = vadd.f32 0.0, %v424
      %v426 = vpop.f32.mrf.mxu0
      %427 = vmatprep.mubr.f32.mxu0 0.0
      %428 = vmatmul.mubr.f32.gmra.mxu0 %v262
      %v429 = vpop.f32.mrf.mxu0
      %v430 = vadd.f32 0.0, %v429
      %v431 = vpop.f32.mrf.mxu0
      %432 = vmatprep.mubr.f32.mxu0 0.0
      %433 = vmatmul.mubr.f32.gmra.mxu0 %v265
      %v434 = vpop.f32.mrf.mxu0
      %v435 = vadd.f32 0.0, %v434
      %v436 = vpop.f32.mrf.mxu0
      %437 = vmatprep.mubr.f32.mxu0 0.0
      %438 = vmatmul.mubr.f32.gmra.mxu0 %v268
      %v439 = vpop.f32.mrf.mxu0
      %v440 = vadd.f32 0.0, %v439
      %v441 = vpop.f32.mrf.mxu0
      %442 = vmatprep.mubr.f32.mxu0 0.0
      %443 = vmatmul.mubr.f32.gmra.mxu0 %v271
      %v444 = vpop.f32.mrf.mxu0
      %v445 = vadd.f32 0.0, %v444
      %v446 = vpop.f32.mrf.mxu0
      %447 = vmatprep.mubr.f32.mxu0 0.0
      %448 = vmatmul.mubr.f32.gmra.mxu0 %v274
      %v449 = vpop.f32.mrf.mxu0
      %v450 = vadd.f32 0.0, %v449
      %v451 = vpop.f32.mrf.mxu0
      %452 = vmatprep.mubr.f32.mxu0 0.0
      %453 = vmatmul.mubr.f32.gmra.mxu0 %v277
      %v454 = vpop.f32.mrf.mxu0
      %v455 = vadd.f32 0.0, %v454
      %v456 = vpop.f32.mrf.mxu0
      %457 = vmatprep.mubr.f32.mxu0 0.0
      %458 = vmatmul.mubr.f32.gmra.mxu0 %v280
      %v459 = vpop.f32.mrf.mxu0
      %v460 = vadd.f32 0.0, %v459
      %v461 = vpop.f32.mrf.mxu0
      %462 = vmatprep.mubr.f32.mxu0 0.0
      %463 = vmatmul.mubr.f32.gmra.mxu0 %v283
      %v464 = vpop.f32.mrf.mxu0
      %v465 = vadd.f32 0.0, %v464
      %v466 = vpop.f32.mrf.mxu0
      %467 = vmatprep.mubr.f32.mxu0 0.0
      %468 = vmatmul.mubr.f32.gmra.mxu0 %v286
      %v469 = vpop.f32.mrf.mxu0
      %v470 = vadd.f32 0.0, %v469
      %v471 = vpop.f32.mrf.mxu0
      %472 = vmatprep.mubr.f32.mxu0 0.0
      %473 = vmatmul.mubr.f32.gmra.mxu0 %v289
      %v474 = vpop.f32.mrf.mxu0
      %v475 = vadd.f32 0.0, %v474
      %v476 = vpop.f32.mrf.mxu0
      %477 = vmatprep.mubr.f32.mxu0 0.0
      %478 = vmatmul.mubr.f32.gmra.mxu0 %v292
      %v479 = vpop.f32.mrf.mxu0
      %v480 = vadd.f32 0.0, %v479
      %v481 = vpop.f32.mrf.mxu0
      %482 = vmatprep.mubr.f32.mxu0 0.0
      %483 = vmatmul.mubr.f32.gmra.mxu0 %v295
      %v484 = vpop.f32.mrf.mxu0
      %v485 = vadd.f32 0.0, %v484
      %v486 = vpop.f32.mrf.mxu0
      %487 = vmatprep.mubr.f32.mxu0 0.0
      %488 = vmatmul.mubr.f32.gmra.mxu0 %v298
      %v489 = vpop.f32.mrf.mxu0
      %v490 = vadd.f32 0.0, %v489
      %v491 = vpop.f32.mrf.mxu0
      %492 = vmatprep.mubr.f32.mxu0 0.0
      %493 = vmatmul.mubr.f32.gmra.mxu0 %v301
      %v494 = vpop.f32.mrf.mxu0
      %v495 = vadd.f32 0.0, %v494
      %v496 = vpop.f32.mrf.mxu0
      %497 = vmatprep.mubr.f32.mxu0 0.0
      %498 = vmatmul.mubr.f32.gmra.mxu0 %v304
      %v499 = vpop.f32.mrf.mxu0
      %v500 = vadd.f32 0.0, %v499
      %v501 = vpop.f32.mrf.mxu0
      %502 = vmatprep.mubr.f32.mxu0 0.0
      %503 = vmatmul.mubr.f32.gmra.mxu0 %v307
      %v504 = vpop.f32.mrf.mxu0
      %v505 = vadd.f32 0.0, %v504
      %v506 = vpop.f32.mrf.mxu0
      %507 = vmatprep.mubr.f32.mxu0 0.0
      %508 = vmatmul.mubr.f32.gmra.mxu0 %v310
      %v509 = vpop.f32.mrf.mxu0
      %v510 = vadd.f32 0.0, %v509
      %v511 = vpop.f32.mrf.mxu0
      %512 = vmatprep.mubr.f32.mxu0 0.0
      %513 = vmatmul.mubr.f32.gmra.mxu0 %v313
      %v514 = vpop.f32.mrf.mxu0
      %v515 = vadd.f32 0.0, %v514
      %v516 = vpop.f32.mrf.mxu0
      %517 = vmatprep.mubr.f32.mxu0 0.0
      %518 = vmatmul.mubr.f32.gmra.mxu0 %v316
      %v519 = vpop.f32.mrf.mxu0
      %v520 = vadd.f32 0.0, %v519
      %v521 = vpop.f32.mrf.mxu0
      %522 = vmatprep.mubr.f32.mxu0 0.0
      %523 = vmatmul.mubr.f32.gmra.mxu0 %v319
      %v524 = vpop.f32.mrf.mxu0
      %v525 = vadd.f32 0.0, %v524
      %v526 = vpop.f32.mrf.mxu0
      %527 = vmatprep.mubr.f32.mxu0 0.0
      %528 = vmatmul.mubr.f32.gmra.mxu0 %v322
      %v529 = vpop.f32.mrf.mxu0
      %v530 = vadd.f32 0.0, %v529
      %v531 = vpop.f32.mrf.mxu0
      %532 = vmatprep.mubr.f32.mxu0 0.0
      %533 = vmatmul.mubr.f32.gmra.mxu0 %v325
      %v534 = vpop.f32.mrf.mxu0
      %v535 = vadd.f32 0.0, %v534
      %v536 = vpop.f32.mrf.mxu0
      %537 = vmatprep.mubr.f32.mxu0 0.0
      %538 = vmatmul.mubr.f32.gmra.mxu0 %v328
      %v539 = vpop.f32.mrf.mxu0
      %v540 = vadd.f32 0.0, %v539
      %v541 = vpop.f32.mrf.mxu0
      %542 = vmatprep.mubr.f32.mxu0 0.0
      %543 = vmatmul.mubr.f32.gmra.mxu0 %v331
      %v544 = vpop.f32.mrf.mxu0
      %v545 = vadd.f32 0.0, %v544
      %v546 = vpop.f32.mrf.mxu0
      %547 = vmatprep.mubr.f32.mxu0 0.0
      %548 = vmatmul.mubr.f32.gmra.mxu0 %v334
      %v549 = vpop.f32.mrf.mxu0
      %v550 = vadd.f32 0.0, %v549
      %v551 = vpop.f32.mrf.mxu0
      %552 = vmatprep.mubr.f32.mxu0 0.0
      %553 = vmatmul.mubr.f32.gmra.mxu0 %v337
      %v554 = vpop.f32.mrf.mxu0
      %v555 = vadd.f32 0.0, %v554
      %v556 = vpop.f32.mrf.mxu0
      %557 = vmatprep.mubr.f32.mxu0 0.0
      %558 = vmatmul.mubr.f32.gmra.mxu0 %v340
      %v559 = vpop.f32.mrf.mxu0
      %v560 = vadd.f32 0.0, %v559
      %v561 = vpop.f32.mrf.mxu0
      %562 = vmatprep.mubr.f32.mxu0 0.0
      %563 = vmatmul.mubr.f32.gmra.mxu0 %v343
      %v564 = vpop.f32.mrf.mxu0
      %v565 = vadd.f32 0.0, %v564
      %v566 = vpop.f32.mrf.mxu0
      %567 = vmatprep.mubr.f32.mxu0 0.0
      %568 = vmatmul.mubr.f32.gmra.mxu0 %v346
      %v569 = vpop.f32.mrf.mxu0
      %v570 = vadd.f32 0.0, %v569
      %v571 = vpop.f32.mrf.mxu0
      %572 = vdwg.mxu0
      %573 = vst.msk [vmem:[%s213] sm:$0xff] %vm251, %v415
      %574 = vst.msk [vmem:[%s213 + $0x8] sm:$0xff] %vm251, %v420
      %575 = vst.msk [vmem:[%s213 + $0x10] sm:$0xff] %vm251, %v425
      %576 = vst.msk [vmem:[%s213 + $0x18] sm:$0xff] %vm251, %v430
      %577 = vst.msk [vmem:[%s213 + $0x20] sm:$0xff] %vm251, %v435
      %578 = vst.msk [vmem:[%s213 + $0x28] sm:$0xff] %vm251, %v440
      %579 = vst.msk [vmem:[%s213 + $0x30] sm:$0xff] %vm251, %v445
      %580 = vst.msk [vmem:[%s213 + $0x38] sm:$0xff] %vm251, %v450
      %581 = vst.msk [vmem:[%s213 + $0x40] sm:$0xff] %vm251, %v455
      %582 = vst.msk [vmem:[%s213 + $0x48] sm:$0xff] %vm251, %v460
      %583 = vst.msk [vmem:[%s213 + $0x50] sm:$0xff] %vm251, %v465
      %584 = vst.msk [vmem:[%s213 + $0x58] sm:$0xff] %vm251, %v470
      %585 = vst.msk [vmem:[%s213 + $0x60] sm:$0xff] %vm251, %v475
      %586 = vst.msk [vmem:[%s213 + $0x68] sm:$0xff] %vm251, %v480
      %587 = vst.msk [vmem:[%s213 + $0x70] sm:$0xff] %vm251, %v485
      %588 = vst.msk [vmem:[%s213 + $0x78] sm:$0xff] %vm251, %v490
      %589 = vst.msk [vmem:[%s213 + $0x80] sm:$0xff] %vm251, %v495
      %590 = vst.msk [vmem:[%s213 + $0x88] sm:$0xff] %vm251, %v500
      %591 = vst.msk [vmem:[%s213 + $0x90] sm:$0xff] %vm251, %v505
      %592 = vst.msk [vmem:[%s213 + $0x98] sm:$0xff] %vm251, %v510
      %593 = vst.msk [vmem:[%s213 + $0xa0] sm:$0xff] %vm251, %v515
      %594 = vst.msk [vmem:[%s213 + $0xa8] sm:$0xff] %vm251, %v520
      %595 = vst.msk [vmem:[%s213 + $0xb0] sm:$0xff] %vm251, %v525
      %596 = vst.msk [vmem:[%s213 + $0xb8] sm:$0xff] %vm251, %v530
      %597 = vst.msk [vmem:[%s213 + $0xc0] sm:$0xff] %vm251, %v535
      %598 = vst.msk [vmem:[%s213 + $0xc8] sm:$0xff] %vm251, %v540
      %599 = vst.msk [vmem:[%s213 + $0xd0] sm:$0xff] %vm251, %v545
      %600 = vst.msk [vmem:[%s213 + $0xd8] sm:$0xff] %vm251, %v550
      %601 = vst.msk [vmem:[%s213 + $0xe0] sm:$0xff] %vm251, %v555
      %602 = vst.msk [vmem:[%s213 + $0xe8] sm:$0xff] %vm251, %v560
      %603 = vst.msk [vmem:[%s213 + $0xf0] sm:$0xff] %vm251, %v565
      %604 = vst.msk [vmem:[%s213 + $0xf8] sm:$0xff] %vm251, %v570
      %s605 = smul.u32 32, %s18
      %p606 = scmp.lt.s32.totalorder %s20, 2
      %s607 = scalar_select %p606, %s20, 2
      %p608 = scmp.lt.s32.totalorder %s605, 31
      %s609 = scalar_select %p608, %s605, 31
      %p610 = scmp.lt.s32.totalorder %s19, 0
      %s611 = scalar_select %p610, %s19, 0
      %s612 = sadd.s32 %s611, %s609
      %s613 = smul.addr %s607, 32
      %s614 = sadd.s32 %s612, %s613
      %s615 = smul.addr %s614, 8
      %s616 = scalar_lea.vmem %s2, %s615
      // Predicated region
      $region29: #{tpu_custom_call.1} parent=27 // pred_check
        %p617 = pneg %p108
      $region30: #{tpu_custom_call.1} parent=27 // pred_check_branch
        %619 = sbr.rel (%p617) target = $region32
      $region31: #{tpu_custom_call.1} parent=27 // pred_region
        %s620 = smul.u32 32, %s18
      $region32: #{tpu_custom_call.1} parent=27 // pred_fallthru
        _
    $region28: #{tpu_custom_call.1} parent=5 // pred_fallthru
      _
    %p621 = scmp.le.s32.totalorder 2, %s8
    // Predicated region
    $region33: #{tpu_custom_call.1} parent=5 // pred_check
      %p622 = pneg %p621
    $region34: #{tpu_custom_call.1} parent=5 // pred_check_branch
      %624 = sbr.rel (%p622) target = $region36
    $region35: #{tpu_custom_call.1} parent=5 // pred_region
      %s625 = ssub.s32 %s8, 2
      // Predicated region
      $region37: #{tpu_custom_call.1} parent=35 // pred_check
        %p626 = pneg %p114
      $region38: #{tpu_custom_call.1} parent=35 // pred_check_branch
        %628 = sbr.rel (%p626) target = $region40
      $region39: #{tpu_custom_call.1} parent=35 // pred_region
        %s629 = smul.u32 32, %s21
        %p630 = scmp.lt.s32.totalorder %s23, 2
        %s631 = scalar_select %p630, %s23, 2
        %p632 = scmp.lt.s32.totalorder %s629, 31
        %s633 = scalar_select %p632, %s629, 31
        %p634 = scmp.lt.s32.totalorder %s22, 0
        %s635 = scalar_select %p634, %s22, 0
        %s636 = sadd.s32 %s635, %s633
        %s637 = smul.addr %s631, 32
        %s638 = sadd.s32 %s636, %s637
        %s639 = smul.addr %s638, 8
        %s640 = scalar_lea.vmem %s2, %s639
      $region40: #{tpu_custom_call.1} parent=35 // pred_fallthru
        _
    $region36: #{tpu_custom_call.1} parent=5 // pred_fallthru
      _
  $region6: #{tpu_custom_call.1} parent=0 // loop_footer
    %s12 = sadd.s32 1, %s8
  $region7: #{tpu_custom_call.1} parent=0 // loop_footer_branch
    %7 = sbr.rel target = $region3
  $region8: #{tpu_custom_call.1} parent=0 // loop_exit
    _

</llo_original>
